<compile_context>
chip_gen: v7x
topology: tpu7x:2x2x1
jax: 0.10.0
libtpu: 0.0.40
codegen_flags: <defaults>
</compile_context>

<pallas_src>
import functools

import jax
import jax.numpy as jnp
import numpy as np
from jax.experimental import pallas as pl
from jax.experimental.pallas import tpu as pltpu

LANE = 128
MAX_TILE_M = 512   # 512 rows x 128 lanes = 65536 neurons per tile (~1 MiB bf16 block @ TT=8)
MAX_TT = 8         # time steps processed per grid iteration


def _round_up(x, m):
    return ((x + m - 1) // m) * m


def _izhikevich_kernel(x_ref, spikes_ref, v_ref, u_ref,
                       *, tt, a, b, c, d, dt, thr):
    t_blk = pl.program_id(1)

    # Fresh zero state at the first time block of every neuron tile.
    @pl.when(t_blk == 0)
    def _():
        v_ref[...] = jnp.zeros_like(v_ref)
        u_ref[...] = jnp.zeros_like(u_ref)

    v = v_ref[...]
    u = u_ref[...]

    # Constant-folded recovery update:  u += dt*a*(b*v - u)  ==  k_u*u + k_v*v
    k_u = 1.0 - dt * a
    k_v = dt * a * b

    # Fully unrolled at trace time (tt is small & static); v,u stay in vregs
    # across the in-block time steps, scratch written once at the end.
    for k in range(tt):
        x = x_ref[k].astype(jnp.float32)
        dv = 0.04 * v * v + 5.0 * v + 140.0 - u + x
        v = (v + dv) if dt == 1.0 else (v + dt * dv)
        u = k_u * u + k_v * v
        spk = v >= thr
        spikes_ref[k] = spk.astype(spikes_ref.dtype)
        v = jnp.where(spk, c, v)
        u = jnp.where(spk, u + d, u)

    v_ref[...] = v
    u_ref[...] = u


def adaptive_izhikevich_forward(x, *, a=0.02, b=0.2, c=-65.0, d=8.0,
                                dt=1.0, spike_threshold=30.0,
                                io_dtype=jnp.bfloat16):
    """Forward pass of AdaptiveIzhikevichNeuron (fresh zero state, returns f32 spikes)."""
    orig_ndim = x.ndim
    if orig_ndim == 3:
        x = x[..., None]
    B, C, N, T = x.shape
    total = B * C * N

    # Neuron-axis tiling: rows of 128 lanes, tile rows a multiple of 8 (sublane).
    M = pl.cdiv(total, LANE)
    tile_m = min(MAX_TILE_M, _round_up(M, 8))
    n_m = pl.cdiv(M, tile_m)
    m_pad = n_m * tile_m

    # Time blocking.
    tt = min(MAX_TT, T)
    n_t = pl.cdiv(T, tt)
    t_pad = n_t * tt

    # (B,C,N,T) -> bf16 time-major (T, neurons) -> padded (t_pad, m_pad, 128).
    # Casting to bf16 before the transpose halves the plumbing HBM traffic too.
    xt = jnp.transpose(x.reshape(total, T).astype(io_dtype), (1, 0))
    xt = jnp.pad(xt, ((0, t_pad - T), (0, m_pad * LANE - total)))
    xt = xt.reshape(t_pad, m_pad, LANE)

    kernel = functools.partial(
        _izhikevich_kernel, tt=tt,
        a=float(a), b=float(b), c=float(c), d=float(d),
        dt=float(dt), thr=float(spike_threshold),
    )

    spikes_t = pl.pallas_call(
        kernel,
        out_shape=jax.ShapeDtypeStruct((t_pad, m_pad, LANE), io_dtype),
        grid_spec=pltpu.PrefetchScalarGridSpec(
            num_scalar_prefetch=0,
            grid=(n_m, n_t),  # neuron tiles (parallel), time blocks (sequential, last)
            in_specs=[pl.BlockSpec((tt, tile_m, LANE), lambda i, j: (j, i, 0))],
            out_specs=pl.BlockSpec((tt, tile_m, LANE), lambda i, j: (j, i, 0)),
            scratch_shapes=[
                pltpu.VMEM((tile_m, LANE), jnp.float32),  # v state
                pltpu.VMEM((tile_m, LANE), jnp.float32),  # u state
            ],
        ),
        compiler_params=pltpu.CompilerParams(
            dimension_semantics=("parallel", "arbitrary"),
        ),
    )(xt)

    # (t_pad, m_pad, 128) -> strip padding -> (B, C, N, T) float32.
    spikes = spikes_t.reshape(t_pad, m_pad * LANE)[:T, :total]
    spikes = jnp.transpose(spikes, (1, 0)).reshape(B, C, N, T).astype(jnp.float32)
    if orig_ndim == 3:
        spikes = spikes[..., 0]
    return spikes


def _reference_forward(x, *, a=0.02, b=0.2, c=-65.0, d=8.0,
                       dt=1.0, spike_threshold=30.0):
    """Pure-JAX reference.

    Mirrors the kernel's arithmetic exactly (bf16-quantized input, f32 compute,
    folded recovery update — mathematically equivalent to the PyTorch loop) so
    the binary spike comparison is not flipped by rounding-order differences.
    """
    orig_ndim = x.ndim
    if orig_ndim == 3:
        x = x[..., None]
    B, C, N, T = x.shape
    xq = x.astype(jnp.bfloat16).astype(jnp.float32)
    v = jnp.zeros((B, C, N), jnp.float32)
    u = jnp.zeros((B, C, N), jnp.float32)
    k_u = 1.0 - dt * a
    k_v = dt * a * b
    spikes = []
    for t in range(T):
        dv = 0.04 * v * v + 5.0 * v + 140.0 - u + xq[..., t]
        v = (v + dv) if dt == 1.0 else (v + dt * dv)
        u = k_u * u + k_v * v
        spk = v >= spike_threshold
        spikes.append(spk.astype(jnp.float32))
        v = jnp.where(spk, c, v)
        u = jnp.where(spk, u + d, u)
    out = jnp.stack(spikes, axis=-1)
    if orig_ndim == 3:
        out = out[..., 0]
    return out


if __name__ == "__main__":
    key = jax.random.PRNGKey(0)
    B, C, N, T = 2, 4, 16, 16
    # Module defaults (nn.Parameter scalars), deterministic.
    params = dict(a=0.02, b=0.2, c=-65.0, d=8.0, dt=1.0, spike_threshold=30.0)

    # Positive-ish drive so spikes actually occur.
    x = 15.0 * jax.random.normal(key, (B, C, N, T), dtype=jnp.float32) + 10.0

    spikes = jax.block_until_ready(adaptive_izhikevich_forward(x, **params))
    ref = jax.block_until_ready(_reference_forward(x, **params))

    np.testing.assert_allclose(np.asarray(spikes), np.asarray(ref), atol=1e-5)
    assert spikes.shape == (B, C, N, T)
    print("KERNEL_OK")
</pallas_src>

<mosaic_0001>
module attributes {stable_mosaic.version = 11 : i64} {
  func.func @_izhikevich_kernel(%arg0: i32, %arg1: i32, %arg2: memref<8x8x128xbf16, #tpu.memory_space<vmem>>, %arg3: memref<8x8x128xbf16, #tpu.memory_space<vmem>>, %arg4: memref<8x128xf32, #tpu.memory_space<vmem>>, %arg5: memref<8x128xf32, #tpu.memory_space<vmem>>) attributes {dimension_semantics = [#tpu.dimension_semantics<parallel>, #tpu.dimension_semantics<arbitrary>], iteration_bounds = array<i64: 1, 2>, scalar_prefetch = 0 : i64, scratch_operands = 2 : i64, tpu.core_type = #tpu.core_type<tc>, window_params = [{transform_indices = @transform_0, window_bounds = array<i64: 8, 8, 128>}, {transform_indices = @transform_1, window_bounds = array<i64: 8, 8, 128>}]} {
    %c0_i32 = arith.constant 0 : i32
    %0 = arith.cmpi eq, %arg1, %c0_i32 : i32
    %1 = arith.extui %0 : i1 to i32
    %c0_i32_0 = arith.constant 0 : i32
    %2 = arith.cmpi ne, %1, %c0_i32_0 : i32
    scf.if %2 {
      %cst_112 = arith.constant 0.000000e+00 : f32
      %263 = vector.broadcast %cst_112 : f32 to vector<8x128xf32>
      %c0_113 = arith.constant 0 : index
      %c0_114 = arith.constant 0 : index
      %264 = vector.load %arg4[%c0_113, %c0_114] : memref<8x128xf32, #tpu.memory_space<vmem>>, vector<8x128xf32>
      tpu.vector_store %arg4[%c0_113, %c0_114], %263 {strides = array<i32>} : memref<8x128xf32, #tpu.memory_space<vmem>>, vector<8x128xf32>,
      %cst_115 = arith.constant 0.000000e+00 : f32
      %265 = vector.broadcast %cst_115 : f32 to vector<8x128xf32>
      %c0_116 = arith.constant 0 : index
      %c0_117 = arith.constant 0 : index
      %266 = vector.load %arg5[%c0_116, %c0_117] : memref<8x128xf32, #tpu.memory_space<vmem>>, vector<8x128xf32>
      tpu.vector_store %arg5[%c0_116, %c0_117], %265 {strides = array<i32>} : memref<8x128xf32, #tpu.memory_space<vmem>>, vector<8x128xf32>,
    } else {
    }
    %c0 = arith.constant 0 : index
    %c0_1 = arith.constant 0 : index
    %3 = vector.load %arg4[%c0, %c0_1] : memref<8x128xf32, #tpu.memory_space<vmem>>, vector<8x128xf32>
    %c0_2 = arith.constant 0 : index
    %c0_3 = arith.constant 0 : index
    %4 = vector.load %arg5[%c0_2, %c0_3] : memref<8x128xf32, #tpu.memory_space<vmem>>, vector<8x128xf32>
    %c0_4 = arith.constant 0 : index
    %c0_5 = arith.constant 0 : index
    %c0_6 = arith.constant 0 : index
    %5 = vector.load %arg2[%c0_4, %c0_5, %c0_6] : memref<8x8x128xbf16, #tpu.memory_space<vmem>>, vector<1x8x128xbf16>
    %6 = vector.shape_cast %5 : vector<1x8x128xbf16> to vector<8x128xbf16>
    %7 = arith.extf %6 : vector<8x128xbf16> to vector<8x128xf32>
    %cst = arith.constant 4.000000e-02 : f32
    %8 = vector.broadcast %cst : f32 to vector<8x128xf32>
    %9 = arith.mulf %8, %3 : vector<8x128xf32>
    %10 = arith.mulf %9, %3 : vector<8x128xf32>
    %cst_7 = arith.constant 5.000000e+00 : f32
    %11 = vector.broadcast %cst_7 : f32 to vector<8x128xf32>
    %12 = arith.mulf %11, %3 : vector<8x128xf32>
    %13 = arith.addf %10, %12 : vector<8x128xf32>
    %cst_8 = arith.constant 1.400000e+02 : f32
    %14 = vector.broadcast %cst_8 : f32 to vector<8x128xf32>
    %15 = arith.addf %13, %14 : vector<8x128xf32>
    %16 = arith.subf %15, %4 : vector<8x128xf32>
    %17 = arith.addf %16, %7 : vector<8x128xf32>
    %18 = arith.addf %3, %17 : vector<8x128xf32>
    %cst_9 = arith.constant 9.800000e-01 : f32
    %19 = vector.broadcast %cst_9 : f32 to vector<8x128xf32>
    %20 = arith.mulf %19, %4 : vector<8x128xf32>
    %cst_10 = arith.constant 4.000000e-03 : f32
    %21 = vector.broadcast %cst_10 : f32 to vector<8x128xf32>
    %22 = arith.mulf %21, %18 : vector<8x128xf32>
    %23 = arith.addf %20, %22 : vector<8x128xf32>
    %cst_11 = arith.constant 3.000000e+01 : f32
    %24 = vector.broadcast %cst_11 : f32 to vector<8x128xf32>
    %25 = arith.cmpf oge, %18, %24 : vector<8x128xf32>
    %26 = arith.extui %25 : vector<8x128xi1> to vector<8x128xi32>
    %27 = arith.sitofp %26 : vector<8x128xi32> to vector<8x128xf32>
    %28 = arith.truncf %27 : vector<8x128xf32> to vector<8x128xbf16>
    %c0_12 = arith.constant 0 : index
    %c0_13 = arith.constant 0 : index
    %c0_14 = arith.constant 0 : index
    %29 = vector.load %arg3[%c0_12, %c0_13, %c0_14] : memref<8x8x128xbf16, #tpu.memory_space<vmem>>, vector<1x8x128xbf16>
    %30 = vector.shape_cast %29 : vector<1x8x128xbf16> to vector<8x128xbf16>
    %31 = vector.shape_cast %28 : vector<8x128xbf16> to vector<1x8x128xbf16>
    tpu.vector_store %arg3[%c0_12, %c0_13, %c0_14], %31 {strides = array<i32>} : memref<8x8x128xbf16, #tpu.memory_space<vmem>>, vector<1x8x128xbf16>,
    %cst_15 = arith.constant -6.500000e+01 : f32
    %32 = vector.broadcast %cst_15 : f32 to vector<8x128xf32>
    %33 = arith.select %25, %32, %18 : vector<8x128xi1>, vector<8x128xf32>
    %cst_16 = arith.constant 8.000000e+00 : f32
    %34 = vector.broadcast %cst_16 : f32 to vector<8x128xf32>
    %35 = arith.addf %23, %34 : vector<8x128xf32>
    %36 = arith.select %25, %35, %23 : vector<8x128xi1>, vector<8x128xf32>
    %c1 = arith.constant 1 : index
    %c0_17 = arith.constant 0 : index
    %c0_18 = arith.constant 0 : index
    %37 = vector.load %arg2[%c1, %c0_17, %c0_18] : memref<8x8x128xbf16, #tpu.memory_space<vmem>>, vector<1x8x128xbf16>
    %38 = vector.shape_cast %37 : vector<1x8x128xbf16> to vector<8x128xbf16>
    %39 = arith.extf %38 : vector<8x128xbf16> to vector<8x128xf32>
    %cst_19 = arith.constant 4.000000e-02 : f32
    %40 = vector.broadcast %cst_19 : f32 to vector<8x128xf32>
    %41 = arith.mulf %40, %33 : vector<8x128xf32>
    %42 = arith.mulf %41, %33 : vector<8x128xf32>
    %cst_20 = arith.constant 5.000000e+00 : f32
    %43 = vector.broadcast %cst_20 : f32 to vector<8x128xf32>
    %44 = arith.mulf %43, %33 : vector<8x128xf32>
    %45 = arith.addf %42, %44 : vector<8x128xf32>
    %cst_21 = arith.constant 1.400000e+02 : f32
    %46 = vector.broadcast %cst_21 : f32 to vector<8x128xf32>
    %47 = arith.addf %45, %46 : vector<8x128xf32>
    %48 = arith.subf %47, %36 : vector<8x128xf32>
    %49 = arith.addf %48, %39 : vector<8x128xf32>
    %50 = arith.addf %33, %49 : vector<8x128xf32>
    %cst_22 = arith.constant 9.800000e-01 : f32
    %51 = vector.broadcast %cst_22 : f32 to vector<8x128xf32>
    %52 = arith.mulf %51, %36 : vector<8x128xf32>
    %cst_23 = arith.constant 4.000000e-03 : f32
    %53 = vector.broadcast %cst_23 : f32 to vector<8x128xf32>
    %54 = arith.mulf %53, %50 : vector<8x128xf32>
    %55 = arith.addf %52, %54 : vector<8x128xf32>
    %cst_24 = arith.constant 3.000000e+01 : f32
    %56 = vector.broadcast %cst_24 : f32 to vector<8x128xf32>
    %57 = arith.cmpf oge, %50, %56 : vector<8x128xf32>
    %58 = arith.extui %57 : vector<8x128xi1> to vector<8x128xi32>
    %59 = arith.sitofp %58 : vector<8x128xi32> to vector<8x128xf32>
    %60 = arith.truncf %59 : vector<8x128xf32> to vector<8x128xbf16>
    %c1_25 = arith.constant 1 : index
    %c0_26 = arith.constant 0 : index
    %c0_27 = arith.constant 0 : index
    %61 = vector.load %arg3[%c1_25, %c0_26, %c0_27] : memref<8x8x128xbf16, #tpu.memory_space<vmem>>, vector<1x8x128xbf16>
    %62 = vector.shape_cast %61 : vector<1x8x128xbf16> to vector<8x128xbf16>
    %63 = vector.shape_cast %60 : vector<8x128xbf16> to vector<1x8x128xbf16>
    tpu.vector_store %arg3[%c1_25, %c0_26, %c0_27], %63 {strides = array<i32>} : memref<8x8x128xbf16, #tpu.memory_space<vmem>>, vector<1x8x128xbf16>,
    %cst_28 = arith.constant -6.500000e+01 : f32
    %64 = vector.broadcast %cst_28 : f32 to vector<8x128xf32>
    %65 = arith.select %57, %64, %50 : vector<8x128xi1>, vector<8x128xf32>
    %cst_29 = arith.constant 8.000000e+00 : f32
    %66 = vector.broadcast %cst_29 : f32 to vector<8x128xf32>
    %67 = arith.addf %55, %66 : vector<8x128xf32>
    %68 = arith.select %57, %67, %55 : vector<8x128xi1>, vector<8x128xf32>
    %c2 = arith.constant 2 : index
    %c0_30 = arith.constant 0 : index
    %c0_31 = arith.constant 0 : index
    %69 = vector.load %arg2[%c2, %c0_30, %c0_31] : memref<8x8x128xbf16, #tpu.memory_space<vmem>>, vector<1x8x128xbf16>
    %70 = vector.shape_cast %69 : vector<1x8x128xbf16> to vector<8x128xbf16>
    %71 = arith.extf %70 : vector<8x128xbf16> to vector<8x128xf32>
    %cst_32 = arith.constant 4.000000e-02 : f32
    %72 = vector.broadcast %cst_32 : f32 to vector<8x128xf32>
    %73 = arith.mulf %72, %65 : vector<8x128xf32>
    %74 = arith.mulf %73, %65 : vector<8x128xf32>
    %cst_33 = arith.constant 5.000000e+00 : f32
    %75 = vector.broadcast %cst_33 : f32 to vector<8x128xf32>
    %76 = arith.mulf %75, %65 : vector<8x128xf32>
    %77 = arith.addf %74, %76 : vector<8x128xf32>
    %cst_34 = arith.constant 1.400000e+02 : f32
    %78 = vector.broadcast %cst_34 : f32 to vector<8x128xf32>
    %79 = arith.addf %77, %78 : vector<8x128xf32>
    %80 = arith.subf %79, %68 : vector<8x128xf32>
    %81 = arith.addf %80, %71 : vector<8x128xf32>
    %82 = arith.addf %65, %81 : vector<8x128xf32>
    %cst_35 = arith.constant 9.800000e-01 : f32
    %83 = vector.broadcast %cst_35 : f32 to vector<8x128xf32>
    %84 = arith.mulf %83, %68 : vector<8x128xf32>
    %cst_36 = arith.constant 4.000000e-03 : f32
    %85 = vector.broadcast %cst_36 : f32 to vector<8x128xf32>
    %86 = arith.mulf %85, %82 : vector<8x128xf32>
    %87 = arith.addf %84, %86 : vector<8x128xf32>
    %cst_37 = arith.constant 3.000000e+01 : f32
    %88 = vector.broadcast %cst_37 : f32 to vector<8x128xf32>
    %89 = arith.cmpf oge, %82, %88 : vector<8x128xf32>
    %90 = arith.extui %89 : vector<8x128xi1> to vector<8x128xi32>
    %91 = arith.sitofp %90 : vector<8x128xi32> to vector<8x128xf32>
    %92 = arith.truncf %91 : vector<8x128xf32> to vector<8x128xbf16>
    %c2_38 = arith.constant 2 : index
    %c0_39 = arith.constant 0 : index
    %c0_40 = arith.constant 0 : index
    %93 = vector.load %arg3[%c2_38, %c0_39, %c0_40] : memref<8x8x128xbf16, #tpu.memory_space<vmem>>, vector<1x8x128xbf16>
    %94 = vector.shape_cast %93 : vector<1x8x128xbf16> to vector<8x128xbf16>
    %95 = vector.shape_cast %92 : vector<8x128xbf16> to vector<1x8x128xbf16>
    tpu.vector_store %arg3[%c2_38, %c0_39, %c0_40], %95 {strides = array<i32>} : memref<8x8x128xbf16, #tpu.memory_space<vmem>>, vector<1x8x128xbf16>,
    %cst_41 = arith.constant -6.500000e+01 : f32
    %96 = vector.broadcast %cst_41 : f32 to vector<8x128xf32>
    %97 = arith.select %89, %96, %82 : vector<8x128xi1>, vector<8x128xf32>
    %cst_42 = arith.constant 8.000000e+00 : f32
    %98 = vector.broadcast %cst_42 : f32 to vector<8x128xf32>
    %99 = arith.addf %87, %98 : vector<8x128xf32>
    %100 = arith.select %89, %99, %87 : vector<8x128xi1>, vector<8x128xf32>
    %c3 = arith.constant 3 : index
    %c0_43 = arith.constant 0 : index
    %c0_44 = arith.constant 0 : index
    %101 = vector.load %arg2[%c3, %c0_43, %c0_44] : memref<8x8x128xbf16, #tpu.memory_space<vmem>>, vector<1x8x128xbf16>
    %102 = vector.shape_cast %101 : vector<1x8x128xbf16> to vector<8x128xbf16>
    %103 = arith.extf %102 : vector<8x128xbf16> to vector<8x128xf32>
    %cst_45 = arith.constant 4.000000e-02 : f32
    %104 = vector.broadcast %cst_45 : f32 to vector<8x128xf32>
    %105 = arith.mulf %104, %97 : vector<8x128xf32>
    %106 = arith.mulf %105, %97 : vector<8x128xf32>
    %cst_46 = arith.constant 5.000000e+00 : f32
    %107 = vector.broadcast %cst_46 : f32 to vector<8x128xf32>
    %108 = arith.mulf %107, %97 : vector<8x128xf32>
    %109 = arith.addf %106, %108 : vector<8x128xf32>
    %cst_47 = arith.constant 1.400000e+02 : f32
    %110 = vector.broadcast %cst_47 : f32 to vector<8x128xf32>
    %111 = arith.addf %109, %110 : vector<8x128xf32>
    %112 = arith.subf %111, %100 : vector<8x128xf32>
    %113 = arith.addf %112, %103 : vector<8x128xf32>
    %114 = arith.addf %97, %113 : vector<8x128xf32>
    %cst_48 = arith.constant 9.800000e-01 : f32
    %115 = vector.broadcast %cst_48 : f32 to vector<8x128xf32>
    %116 = arith.mulf %115, %100 : vector<8x128xf32>
    %cst_49 = arith.constant 4.000000e-03 : f32
    %117 = vector.broadcast %cst_49 : f32 to vector<8x128xf32>
    %118 = arith.mulf %117, %114 : vector<8x128xf32>
    %119 = arith.addf %116, %118 : vector<8x128xf32>
    %cst_50 = arith.constant 3.000000e+01 : f32
    %120 = vector.broadcast %cst_50 : f32 to vector<8x128xf32>
    %121 = arith.cmpf oge, %114, %120 : vector<8x128xf32>
    %122 = arith.extui %121 : vector<8x128xi1> to vector<8x128xi32>
    %123 = arith.sitofp %122 : vector<8x128xi32> to vector<8x128xf32>
    %124 = arith.truncf %123 : vector<8x128xf32> to vector<8x128xbf16>
    %c3_51 = arith.constant 3 : index
    %c0_52 = arith.constant 0 : index
    %c0_53 = arith.constant 0 : index
    %125 = vector.load %arg3[%c3_51, %c0_52, %c0_53] : memref<8x8x128xbf16, #tpu.memory_space<vmem>>, vector<1x8x128xbf16>
    %126 = vector.shape_cast %125 : vector<1x8x128xbf16> to vector<8x128xbf16>
    %127 = vector.shape_cast %124 : vector<8x128xbf16> to vector<1x8x128xbf16>
    tpu.vector_store %arg3[%c3_51, %c0_52, %c0_53], %127 {strides = array<i32>} : memref<8x8x128xbf16, #tpu.memory_space<vmem>>, vector<1x8x128xbf16>,
    %cst_54 = arith.constant -6.500000e+01 : f32
    %128 = vector.broadcast %cst_54 : f32 to vector<8x128xf32>
    %129 = arith.select %121, %128, %114 : vector<8x128xi1>, vector<8x128xf32>
    %cst_55 = arith.constant 8.000000e+00 : f32
    %130 = vector.broadcast %cst_55 : f32 to vector<8x128xf32>
    %131 = arith.addf %119, %130 : vector<8x128xf32>
    %132 = arith.select %121, %131, %119 : vector<8x128xi1>, vector<8x128xf32>
    %c4 = arith.constant 4 : index
    %c0_56 = arith.constant 0 : index
    %c0_57 = arith.constant 0 : index
    %133 = vector.load %arg2[%c4, %c0_56, %c0_57] : memref<8x8x128xbf16, #tpu.memory_space<vmem>>, vector<1x8x128xbf16>
    %134 = vector.shape_cast %133 : vector<1x8x128xbf16> to vector<8x128xbf16>
    %135 = arith.extf %134 : vector<8x128xbf16> to vector<8x128xf32>
    %cst_58 = arith.constant 4.000000e-02 : f32
    %136 = vector.broadcast %cst_58 : f32 to vector<8x128xf32>
    %137 = arith.mulf %136, %129 : vector<8x128xf32>
    %138 = arith.mulf %137, %129 : vector<8x128xf32>
    %cst_59 = arith.constant 5.000000e+00 : f32
    %139 = vector.broadcast %cst_59 : f32 to vector<8x128xf32>
    %140 = arith.mulf %139, %129 : vector<8x128xf32>
    %141 = arith.addf %138, %140 : vector<8x128xf32>
    %cst_60 = arith.constant 1.400000e+02 : f32
    %142 = vector.broadcast %cst_60 : f32 to vector<8x128xf32>
    %143 = arith.addf %141, %142 : vector<8x128xf32>
    %144 = arith.subf %143, %132 : vector<8x128xf32>
    %145 = arith.addf %144, %135 : vector<8x128xf32>
    %146 = arith.addf %129, %145 : vector<8x128xf32>
    %cst_61 = arith.constant 9.800000e-01 : f32
    %147 = vector.broadcast %cst_61 : f32 to vector<8x128xf32>
    %148 = arith.mulf %147, %132 : vector<8x128xf32>
    %cst_62 = arith.constant 4.000000e-03 : f32
    %149 = vector.broadcast %cst_62 : f32 to vector<8x128xf32>
    %150 = arith.mulf %149, %146 : vector<8x128xf32>
    %151 = arith.addf %148, %150 : vector<8x128xf32>
    %cst_63 = arith.constant 3.000000e+01 : f32
    %152 = vector.broadcast %cst_63 : f32 to vector<8x128xf32>
    %153 = arith.cmpf oge, %146, %152 : vector<8x128xf32>
    %154 = arith.extui %153 : vector<8x128xi1> to vector<8x128xi32>
    %155 = arith.sitofp %154 : vector<8x128xi32> to vector<8x128xf32>
    %156 = arith.truncf %155 : vector<8x128xf32> to vector<8x128xbf16>
    %c4_64 = arith.constant 4 : index
    %c0_65 = arith.constant 0 : index
    %c0_66 = arith.constant 0 : index
    %157 = vector.load %arg3[%c4_64, %c0_65, %c0_66] : memref<8x8x128xbf16, #tpu.memory_space<vmem>>, vector<1x8x128xbf16>
    %158 = vector.shape_cast %157 : vector<1x8x128xbf16> to vector<8x128xbf16>
    %159 = vector.shape_cast %156 : vector<8x128xbf16> to vector<1x8x128xbf16>
    tpu.vector_store %arg3[%c4_64, %c0_65, %c0_66], %159 {strides = array<i32>} : memref<8x8x128xbf16, #tpu.memory_space<vmem>>, vector<1x8x128xbf16>,
    %cst_67 = arith.constant -6.500000e+01 : f32
    %160 = vector.broadcast %cst_67 : f32 to vector<8x128xf32>
    %161 = arith.select %153, %160, %146 : vector<8x128xi1>, vector<8x128xf32>
    %cst_68 = arith.constant 8.000000e+00 : f32
    %162 = vector.broadcast %cst_68 : f32 to vector<8x128xf32>
    %163 = arith.addf %151, %162 : vector<8x128xf32>
    %164 = arith.select %153, %163, %151 : vector<8x128xi1>, vector<8x128xf32>
    %c5 = arith.constant 5 : index
    %c0_69 = arith.constant 0 : index
    %c0_70 = arith.constant 0 : index
    %165 = vector.load %arg2[%c5, %c0_69, %c0_70] : memref<8x8x128xbf16, #tpu.memory_space<vmem>>, vector<1x8x128xbf16>
    %166 = vector.shape_cast %165 : vector<1x8x128xbf16> to vector<8x128xbf16>
    %167 = arith.extf %166 : vector<8x128xbf16> to vector<8x128xf32>
    %cst_71 = arith.constant 4.000000e-02 : f32
    %168 = vector.broadcast %cst_71 : f32 to vector<8x128xf32>
    %169 = arith.mulf %168, %161 : vector<8x128xf32>
    %170 = arith.mulf %169, %161 : vector<8x128xf32>
    %cst_72 = arith.constant 5.000000e+00 : f32
    %171 = vector.broadcast %cst_72 : f32 to vector<8x128xf32>
    %172 = arith.mulf %171, %161 : vector<8x128xf32>
    %173 = arith.addf %170, %172 : vector<8x128xf32>
    %cst_73 = arith.constant 1.400000e+02 : f32
    %174 = vector.broadcast %cst_73 : f32 to vector<8x128xf32>
    %175 = arith.addf %173, %174 : vector<8x128xf32>
    %176 = arith.subf %175, %164 : vector<8x128xf32>
    %177 = arith.addf %176, %167 : vector<8x128xf32>
    %178 = arith.addf %161, %177 : vector<8x128xf32>
    %cst_74 = arith.constant 9.800000e-01 : f32
    %179 = vector.broadcast %cst_74 : f32 to vector<8x128xf32>
    %180 = arith.mulf %179, %164 : vector<8x128xf32>
    %cst_75 = arith.constant 4.000000e-03 : f32
    %181 = vector.broadcast %cst_75 : f32 to vector<8x128xf32>
    %182 = arith.mulf %181, %178 : vector<8x128xf32>
    %183 = arith.addf %180, %182 : vector<8x128xf32>
    %cst_76 = arith.constant 3.000000e+01 : f32
    %184 = vector.broadcast %cst_76 : f32 to vector<8x128xf32>
    %185 = arith.cmpf oge, %178, %184 : vector<8x128xf32>
    %186 = arith.extui %185 : vector<8x128xi1> to vector<8x128xi32>
    %187 = arith.sitofp %186 : vector<8x128xi32> to vector<8x128xf32>
    %188 = arith.truncf %187 : vector<8x128xf32> to vector<8x128xbf16>
    %c5_77 = arith.constant 5 : index
    %c0_78 = arith.constant 0 : index
    %c0_79 = arith.constant 0 : index
    %189 = vector.load %arg3[%c5_77, %c0_78, %c0_79] : memref<8x8x128xbf16, #tpu.memory_space<vmem>>, vector<1x8x128xbf16>
    %190 = vector.shape_cast %189 : vector<1x8x128xbf16> to vector<8x128xbf16>
    %191 = vector.shape_cast %188 : vector<8x128xbf16> to vector<1x8x128xbf16>
    tpu.vector_store %arg3[%c5_77, %c0_78, %c0_79], %191 {strides = array<i32>} : memref<8x8x128xbf16, #tpu.memory_space<vmem>>, vector<1x8x128xbf16>,
    %cst_80 = arith.constant -6.500000e+01 : f32
    %192 = vector.broadcast %cst_80 : f32 to vector<8x128xf32>
    %193 = arith.select %185, %192, %178 : vector<8x128xi1>, vector<8x128xf32>
    %cst_81 = arith.constant 8.000000e+00 : f32
    %194 = vector.broadcast %cst_81 : f32 to vector<8x128xf32>
    %195 = arith.addf %183, %194 : vector<8x128xf32>
    %196 = arith.select %185, %195, %183 : vector<8x128xi1>, vector<8x128xf32>
    %c6 = arith.constant 6 : index
    %c0_82 = arith.constant 0 : index
    %c0_83 = arith.constant 0 : index
    %197 = vector.load %arg2[%c6, %c0_82, %c0_83] : memref<8x8x128xbf16, #tpu.memory_space<vmem>>, vector<1x8x128xbf16>
    %198 = vector.shape_cast %197 : vector<1x8x128xbf16> to vector<8x128xbf16>
    %199 = arith.extf %198 : vector<8x128xbf16> to vector<8x128xf32>
    %cst_84 = arith.constant 4.000000e-02 : f32
    %200 = vector.broadcast %cst_84 : f32 to vector<8x128xf32>
    %201 = arith.mulf %200, %193 : vector<8x128xf32>
    %202 = arith.mulf %201, %193 : vector<8x128xf32>
    %cst_85 = arith.constant 5.000000e+00 : f32
    %203 = vector.broadcast %cst_85 : f32 to vector<8x128xf32>
    %204 = arith.mulf %203, %193 : vector<8x128xf32>
    %205 = arith.addf %202, %204 : vector<8x128xf32>
    %cst_86 = arith.constant 1.400000e+02 : f32
    %206 = vector.broadcast %cst_86 : f32 to vector<8x128xf32>
    %207 = arith.addf %205, %206 : vector<8x128xf32>
    %208 = arith.subf %207, %196 : vector<8x128xf32>
    %209 = arith.addf %208, %199 : vector<8x128xf32>
    %210 = arith.addf %193, %209 : vector<8x128xf32>
    %cst_87 = arith.constant 9.800000e-01 : f32
    %211 = vector.broadcast %cst_87 : f32 to vector<8x128xf32>
    %212 = arith.mulf %211, %196 : vector<8x128xf32>
    %cst_88 = arith.constant 4.000000e-03 : f32
    %213 = vector.broadcast %cst_88 : f32 to vector<8x128xf32>
    %214 = arith.mulf %213, %210 : vector<8x128xf32>
    %215 = arith.addf %212, %214 : vector<8x128xf32>
    %cst_89 = arith.constant 3.000000e+01 : f32
    %216 = vector.broadcast %cst_89 : f32 to vector<8x128xf32>
    %217 = arith.cmpf oge, %210, %216 : vector<8x128xf32>
    %218 = arith.extui %217 : vector<8x128xi1> to vector<8x128xi32>
    %219 = arith.sitofp %218 : vector<8x128xi32> to vector<8x128xf32>
    %220 = arith.truncf %219 : vector<8x128xf32> to vector<8x128xbf16>
    %c6_90 = arith.constant 6 : index
    %c0_91 = arith.constant 0 : index
    %c0_92 = arith.constant 0 : index
    %221 = vector.load %arg3[%c6_90, %c0_91, %c0_92] : memref<8x8x128xbf16, #tpu.memory_space<vmem>>, vector<1x8x128xbf16>
    %222 = vector.shape_cast %221 : vector<1x8x128xbf16> to vector<8x128xbf16>
    %223 = vector.shape_cast %220 : vector<8x128xbf16> to vector<1x8x128xbf16>
    tpu.vector_store %arg3[%c6_90, %c0_91, %c0_92], %223 {strides = array<i32>} : memref<8x8x128xbf16, #tpu.memory_space<vmem>>, vector<1x8x128xbf16>,
    %cst_93 = arith.constant -6.500000e+01 : f32
    %224 = vector.broadcast %cst_93 : f32 to vector<8x128xf32>
    %225 = arith.select %217, %224, %210 : vector<8x128xi1>, vector<8x128xf32>
    %cst_94 = arith.constant 8.000000e+00 : f32
    %226 = vector.broadcast %cst_94 : f32 to vector<8x128xf32>
    %227 = arith.addf %215, %226 : vector<8x128xf32>
    %228 = arith.select %217, %227, %215 : vector<8x128xi1>, vector<8x128xf32>
    %c7 = arith.constant 7 : index
    %c0_95 = arith.constant 0 : index
    %c0_96 = arith.constant 0 : index
    %229 = vector.load %arg2[%c7, %c0_95, %c0_96] : memref<8x8x128xbf16, #tpu.memory_space<vmem>>, vector<1x8x128xbf16>
    %230 = vector.shape_cast %229 : vector<1x8x128xbf16> to vector<8x128xbf16>
    %231 = arith.extf %230 : vector<8x128xbf16> to vector<8x128xf32>
    %cst_97 = arith.constant 4.000000e-02 : f32
    %232 = vector.broadcast %cst_97 : f32 to vector<8x128xf32>
    %233 = arith.mulf %232, %225 : vector<8x128xf32>
    %234 = arith.mulf %233, %225 : vector<8x128xf32>
    %cst_98 = arith.constant 5.000000e+00 : f32
    %235 = vector.broadcast %cst_98 : f32 to vector<8x128xf32>
    %236 = arith.mulf %235, %225 : vector<8x128xf32>
    %237 = arith.addf %234, %236 : vector<8x128xf32>
    %cst_99 = arith.constant 1.400000e+02 : f32
    %238 = vector.broadcast %cst_99 : f32 to vector<8x128xf32>
    %239 = arith.addf %237, %238 : vector<8x128xf32>
    %240 = arith.subf %239, %228 : vector<8x128xf32>
    %241 = arith.addf %240, %231 : vector<8x128xf32>
    %242 = arith.addf %225, %241 : vector<8x128xf32>
    %cst_100 = arith.constant 9.800000e-01 : f32
    %243 = vector.broadcast %cst_100 : f32 to vector<8x128xf32>
    %244 = arith.mulf %243, %228 : vector<8x128xf32>
    %cst_101 = arith.constant 4.000000e-03 : f32
    %245 = vector.broadcast %cst_101 : f32 to vector<8x128xf32>
    %246 = arith.mulf %245, %242 : vector<8x128xf32>
    %247 = arith.addf %244, %246 : vector<8x128xf32>
    %cst_102 = arith.constant 3.000000e+01 : f32
    %248 = vector.broadcast %cst_102 : f32 to vector<8x128xf32>
    %249 = arith.cmpf oge, %242, %248 : vector<8x128xf32>
    %250 = arith.extui %249 : vector<8x128xi1> to vector<8x128xi32>
    %251 = arith.sitofp %250 : vector<8x128xi32> to vector<8x128xf32>
    %252 = arith.truncf %251 : vector<8x128xf32> to vector<8x128xbf16>
    %c7_103 = arith.constant 7 : index
    %c0_104 = arith.constant 0 : index
    %c0_105 = arith.constant 0 : index
    %253 = vector.load %arg3[%c7_103, %c0_104, %c0_105] : memref<8x8x128xbf16, #tpu.memory_space<vmem>>, vector<1x8x128xbf16>
    %254 = vector.shape_cast %253 : vector<1x8x128xbf16> to vector<8x128xbf16>
    %255 = vector.shape_cast %252 : vector<8x128xbf16> to vector<1x8x128xbf16>
    tpu.vector_store %arg3[%c7_103, %c0_104, %c0_105], %255 {strides = array<i32>} : memref<8x8x128xbf16, #tpu.memory_space<vmem>>, vector<1x8x128xbf16>,
    %cst_106 = arith.constant -6.500000e+01 : f32
    %256 = vector.broadcast %cst_106 : f32 to vector<8x128xf32>
    %257 = arith.select %249, %256, %242 : vector<8x128xi1>, vector<8x128xf32>
    %cst_107 = arith.constant 8.000000e+00 : f32
    %258 = vector.broadcast %cst_107 : f32 to vector<8x128xf32>
    %259 = arith.addf %247, %258 : vector<8x128xf32>
    %260 = arith.select %249, %259, %247 : vector<8x128xi1>, vector<8x128xf32>
    %c0_108 = arith.constant 0 : index
    %c0_109 = arith.constant 0 : index
    %261 = vector.load %arg4[%c0_108, %c0_109] : memref<8x128xf32, #tpu.memory_space<vmem>>, vector<8x128xf32>
    tpu.vector_store %arg4[%c0_108, %c0_109], %257 {strides = array<i32>} : memref<8x128xf32, #tpu.memory_space<vmem>>, vector<8x128xf32>,
    %c0_110 = arith.constant 0 : index
    %c0_111 = arith.constant 0 : index
    %262 = vector.load %arg5[%c0_110, %c0_111] : memref<8x128xf32, #tpu.memory_space<vmem>>, vector<8x128xf32>
    tpu.vector_store %arg5[%c0_110, %c0_111], %260 {strides = array<i32>} : memref<8x128xf32, #tpu.memory_space<vmem>>, vector<8x128xf32>,
    return
  }
  func.func @transform_0(%arg0: i32, %arg1: i32) -> (i32, i32, i32) {
    %c0_i32 = arith.constant 0 : i32
    %c0_i32_0 = arith.constant 0 : i32
    return %arg1, %arg0, %c0_i32 : i32, i32, i32
  }
  func.func @transform_1(%arg0: i32, %arg1: i32) -> (i32, i32, i32) {
    %c0_i32 = arith.constant 0 : i32
    %c0_i32_0 = arith.constant 0 : i32
    return %arg1, %arg0, %c0_i32 : i32, i32, i32
  }
}

</mosaic_0001>

<llo_original>
// kernel: tpu_custom_call.1
$region0: #{tpu_custom_call.1}
  #allocation0 [shape = 'u32[]', space=smem, size = 0x4, offset = 0x4, fixed_abs, tag = 'smem constant byte address 0x4 - core index']
  #allocation1 [shape = 'u32[144,128]{1,0:T(1,128)}', space=vmem, size = 0x12000, scoped, tag = 'internal scratch']
  #allocation2 [shape = 'f32[8,128]{1,0:T(8,128)}', space=vmem, size = 0x1000, scoped, tag = 'scratch operand']
  #allocation3 [shape = 'f32[8,128]{1,0:T(8,128)}', space=vmem, size = 0x1000, scoped, tag = 'scratch operand']
  %s0 = inlined_call_operand.hbm [shape: bf16[16,8,128], index: 0, kind: input, shape index: {}]
  %s1 = inlined_call_operand.hbm [shape: bf16[16,8,128], index: 1, kind: output, shape index: {}]
  %s2 = sld [smem:[#allocation0]]
  $region45: #{tpu_custom_call.1} parent=0
    _
  %s4 = ssub.s32 1, %s2
  %s5 = scalar_select 0, %s4, %s2
  $region1: #{tpu_custom_call.1} parent=0
    #allocation4 [shape = 'u8[32768]{0}', space=vmem, size = 0x8000, scoped, tag = 'input window, operand 0']
    #allocation5 [shape = 's32[2]{0}', space=sflag, size = 0x8, scoped, tag = 'scoped memory for tpu_custom_call.1']
    #allocation6 [shape = 's32[2]{0}', space=sflag, size = 0x8, scoped, tag = 'scoped memory for tpu_custom_call.1']
    #allocation7 [shape = 'u8[32768]{0}', space=vmem, size = 0x8000, scoped, tag = 'output window, operand 0']
    %6 = vsyncpa [#allocation5], 0
    %s7 = scalar_lea.sflag [#allocation5], 1
    %8 = vsyncpa %s7, 0
    %9 = vsyncpa [#allocation6], 0
    %s10 = scalar_lea.sflag [#allocation6], 1
    %11 = vsyncpa %s10, 0
    loop: start=0, step=1, limit=4
    $region2: #{tpu_custom_call.1} parent=1 // loop_pre_header
      _
    $region3: #{tpu_custom_call.1} parent=1 // loop_header
      %s13 = sphi 0, %s17
      %p14 = scmp.ge.s32.totalorder %s13, 4
      %s20 = sphi 0, %s32
      %s21 = sphi 0, %s28
      %s22 = sphi 0, %s20
      %s23 = sphi 0, %s21
      %s24 = sphi 0, %s22
      %s25 = sphi 0, %s23
      %s37 = sphi 0, %s39
      %s40 = sphi 0, %s37
      %s41 = sphi 0, %s40
      %s57 = sphi 0, %s41
      %s65 = sphi 0, %s67
      %s68 = sphi 0, %s65
      %s69 = sphi 0, %s68
      %s85 = sphi 0, %s69
    $region4: #{tpu_custom_call.1} parent=1 // loop_header_branch
      %16 = sbr.rel (%p14) target = $region8
    $region5: #{tpu_custom_call.1} parent=1 // loop_body
      %s18 = ssub.s32 %s13, 1
      %s19 = ssub.s32 %s13, 2
      %s26 = sadd.s32 1, %s21
      %p27 = scmp.ge.s32.totalorder %s26, 2
      %s28 = scalar_select %p27, 0, %s26
      %s29 = sadd.s32 1, %s20
      %s30 = scalar_select %p27, %s29, %s20
      %p31 = scmp.ge.s32.totalorder %s30, 1
      %s32 = scalar_select %p31, 0, %s30
      %s33 = ssub.s32 %s21, %s28
      %s34 = ssub.s32 %s20, %s32
      %s35 = sor.u32 %s33, %s34
      %p36 = scmp.eq.s32.totalorder %s35, 0
      %s38 = sadd.s32 %s37, 1
      %s39 = scalar_select %p36, %s37, %s38
      %p42 = pneg %p36
      %p43 = scmp.eq.s32.totalorder %s13, 1
      %p44 = por %p42, %p43
      %p45 = scmp.ne.s32.totalorder %s37, %s40
      %p46 = scmp.eq.s32.totalorder %s13, 0
      %p47 = por %p45, %p46
      %p48 = scmp.ne.s32.totalorder %s37, %s40
      %p49 = scmp.eq.s32.totalorder %s18, 1
      %p50 = por %p48, %p49
      %p51 = scmp.ne.s32.totalorder %s40, %s41
      %p52 = scmp.eq.s32.totalorder %s18, 0
      %p53 = por %p51, %p52
      %p54 = scmp.ne.s32.totalorder %s40, %s41
      %p55 = scmp.eq.s32.totalorder %s19, 1
      %p56 = por %p54, %p55
      %p58 = scmp.ne.s32.totalorder %s41, %s57
      %p59 = scmp.eq.s32.totalorder %s19, 0
      %p60 = por %p58, %p59
      %s61 = ssub.s32 %s21, %s28
      %s62 = ssub.s32 %s20, %s32
      %s63 = sor.u32 %s61, %s62
      %p64 = scmp.eq.s32.totalorder %s63, 0
      %s66 = sadd.s32 %s65, 1
      %s67 = scalar_select %p64, %s65, %s66
      %p70 = pneg %p64
      %p71 = scmp.eq.s32.totalorder %s13, 1
      %p72 = por %p70, %p71
      %p73 = scmp.ne.s32.totalorder %s65, %s68
      %p74 = scmp.eq.s32.totalorder %s13, 0
      %p75 = por %p73, %p74
      %p76 = scmp.ne.s32.totalorder %s65, %s68
      %p77 = scmp.eq.s32.totalorder %s18, 1
      %p78 = por %p76, %p77
      %p79 = scmp.ne.s32.totalorder %s68, %s69
      %p80 = scmp.eq.s32.totalorder %s18, 0
      %p81 = por %p79, %p80
      %p82 = scmp.ne.s32.totalorder %s68, %s69
      %p83 = scmp.eq.s32.totalorder %s19, 1
      %p84 = por %p82, %p83
      %p86 = scmp.ne.s32.totalorder %s69, %s85
      %p87 = scmp.eq.s32.totalorder %s19, 0
      %p88 = por %p86, %p87
      %p89 = scmp.le.s32.totalorder 1, %s13
      %p90 = scmp.lt.s32.totalorder %s13, 3
      %p91 = pnand %p89, %p90
      %p92 = pneg %p91
      // Predicated region
      $region9: #{tpu_custom_call.1} parent=5 // pred_check
        _
      $region10: #{tpu_custom_call.1} parent=5 // pred_check_branch
        %94 = sbr.rel (%p91) target = $region12
      $region11: #{tpu_custom_call.1} parent=5 // pred_region
        %s95 = ssub.s32 %s13, 1
      $region12: #{tpu_custom_call.1} parent=5 // pred_fallthru
        _
      %p96 = scmp.lt.s32.totalorder %s13, 2
      // Predicated region
      $region13: #{tpu_custom_call.1} parent=5 // pred_check
        %p97 = pneg %p96
      $region14: #{tpu_custom_call.1} parent=5 // pred_check_branch
        %99 = sbr.rel (%p97) target = $region16
      $region15: #{tpu_custom_call.1} parent=5 // pred_region
        // Predicated region
        $region17: #{tpu_custom_call.1} parent=15 // pred_check
          %p100 = pneg %p47
        $region18: #{tpu_custom_call.1} parent=15 // pred_check_branch
          %102 = sbr.rel (%p100) target = $region20
        $region19: #{tpu_custom_call.1} parent=15 // pred_region
          %s103 = sand.u32 %s37, 1
          %s104 = scalar_lea.sflag [#allocation5], %s103
          %s105 = sand.u32 %s37, 1
          %s106 = smul.addr %s105, 32
          %s107 = scalar_lea.vmem [#allocation4], %s106
          %s108 = smul.u32 8, %s21
          %s110 = ssub.s32 512, 512
          %111 = vsyncadd %s104, %s110
          %s112 = sadd.s32 %s20, %s108
          %s113 = smul.addr %s112, 64
          %s114 = scalar_lea.hbm %s0, %s113
          %s115 = sshll.u32 %s107, 4
          %s116 = int_to_ptr.vmem [resolvable:$true] %s115
          %121 = dma.hbm_to_vmem [thread:$0]  %s114, 512, %s116, %s104, 64, 64, 4
        $region20: #{tpu_custom_call.1} parent=15 // pred_fallthru
          _
      $region16: #{tpu_custom_call.1} parent=5 // pred_fallthru
        _
      %p122 = scmp.le.s32.totalorder 1, %s13
      %p123 = scmp.lt.s32.totalorder %s13, 3
      %p124 = pnand %p122, %p123
      %p125 = pneg %p124
      // Predicated region
      $region21: #{tpu_custom_call.1} parent=5 // pred_check
        _
      $region22: #{tpu_custom_call.1} parent=5 // pred_check_branch
        %127 = sbr.rel (%p124) target = $region24
      $region23: #{tpu_custom_call.1} parent=5 // pred_region
        %s128 = ssub.s32 %s13, 1
        %s129 = sand.u32 %s40, 1
        %s130 = scalar_lea.sflag [#allocation5], %s129
        %s131 = sand.u32 %s40, 1
        %s132 = smul.addr %s131, 32
        %s133 = scalar_lea.vmem [#allocation4], %s132
        // Predicated region
        $region25: #{tpu_custom_call.1} parent=23 // pred_check
          %p134 = pneg %p53
        $region26: #{tpu_custom_call.1} parent=23 // pred_check_branch
          %136 = sbr.rel (%p134) target = $region28
        $region27: #{tpu_custom_call.1} parent=23 // pred_region
          %137 = dma.done %s130, 512
        $region28: #{tpu_custom_call.1} parent=23 // pred_fallthru
          _
        %s138 = sand.u32 %s40, 1
        %s139 = scalar_lea.sflag [#allocation5], %s138
        %s140 = sand.u32 %s40, 1
        %s141 = smul.addr %s140, 32
        %s142 = scalar_lea.vmem [#allocation4], %s141
        %p143 = pneg %p53
        %p144 = pneg %p50
        %p145 = pneg %p81
        %p146 = pneg %p78
        %s147 = sand.u32 %s68, 1
        %s148 = scalar_lea.sflag [#allocation6], %s147
        %s149 = sand.u32 %s68, 1
        %s150 = smul.addr %s149, 32
        %s151 = scalar_lea.vmem [#allocation7], %s150
        %s152 = smul.u32 8, %s23
        %s153 = smul.u32 8, %s23
        %p154 = scmp.eq.s32.totalorder %s23, 0
        // Predicated region
        $region29: #{tpu_custom_call.1} parent=23 // pred_check
          %p155 = pneg %p154
        $region30: #{tpu_custom_call.1} parent=23 // pred_check_branch
          %157 = sbr.rel (%p155) target = $region32
        $region31: #{tpu_custom_call.1} parent=23 // pred_region
          %158 = vst [vmem:[#allocation2] sm:$0xff] 0.0
          %159 = vst [vmem:[#allocation3] sm:$0xff] 0.0
        $region32: #{tpu_custom_call.1} parent=23 // pred_fallthru
          _
        %v160 = vld [vmem:[#allocation2] sm:$0xff]
        %v161 = vld [vmem:[#allocation3] sm:$0xff]
        %v162 = vld [vmem:[%s133] sm:$0xf]
        %v163 = vunpack.c.l.bf16 %v162
        %v164 = vmul.f32 %v160, 0.04
        %v165 = vmul.f32 %v164, %v160
        %v166 = vmul.f32 %v160, 5.0
        %v167 = vadd.f32 %v165, %v166
        %v168 = vadd.f32 %v167, 140.0
        %v169 = vsub.f32 %v168, %v161
        %v170 = vadd.f32 %v169, %v163
        %v171 = vadd.f32 %v160, %v170
        %v172 = vmul.f32 %v161, 0.98
        %v173 = vmul.f32 %v171, 0.004
        %v174 = vadd.f32 %v172, %v173
        %vm175 = vcmp.ge.f32.partialorder %v171, 30.0
        %v176 = vsel %vm175, 1, 0
        %v177 = vcvt.s32.f32 %v176
        %v178 = vpack.c.bf16 %v177, %v177
        %179 = vst [vmem:[%s151] sm:$0xf] %v178
        %v180 = vsel %vm175, -65.0, %v171
        %v181 = vadd.f32 %v174, 8.0
        %v182 = vsel %vm175, %v181, %v174
        %s183 = scalar_lea.vmem %s133, 4 [#allocation4]
        %v184 = vld [vmem:[%s183] sm:$0xf]
        %v185 = vunpack.c.l.bf16 %v184
        %v186 = vmul.f32 %v180, 0.04
        %v187 = vmul.f32 %v186, %v180
        %v188 = vmul.f32 %v180, 5.0
        %v189 = vadd.f32 %v187, %v188
        %v190 = vadd.f32 %v189, 140.0
        %v191 = vsub.f32 %v190, %v182
        %v192 = vadd.f32 %v191, %v185
        %v193 = vadd.f32 %v180, %v192
        %v194 = vmul.f32 %v182, 0.98
        %v195 = vmul.f32 %v193, 0.004
        %v196 = vadd.f32 %v194, %v195
        %vm197 = vcmp.ge.f32.partialorder %v193, 30.0
        %v198 = vsel %vm197, 1, 0
        %v199 = vcvt.s32.f32 %v198
        %v200 = vpack.c.bf16 %v199, %v199
        %s201 = scalar_lea.vmem %s151, 4 [#allocation7]
        %202 = vst [vmem:[%s201] sm:$0xf] %v200
        %v203 = vsel %vm197, -65.0, %v193
        %v204 = vadd.f32 %v196, 8.0
        %v205 = vsel %vm197, %v204, %v196
        %s206 = scalar_lea.vmem %s133, 8 [#allocation4]
        %v207 = vld [vmem:[%s206] sm:$0xf]
        %v208 = vunpack.c.l.bf16 %v207
        %v209 = vmul.f32 %v203, 0.04
        %v210 = vmul.f32 %v209, %v203
        %v211 = vmul.f32 %v203, 5.0
        %v212 = vadd.f32 %v210, %v211
        %v213 = vadd.f32 %v212, 140.0
        %v214 = vsub.f32 %v213, %v205
        %v215 = vadd.f32 %v214, %v208
        %v216 = vadd.f32 %v203, %v215
        %v217 = vmul.f32 %v205, 0.98
        %v218 = vmul.f32 %v216, 0.004
        %v219 = vadd.f32 %v217, %v218
        %vm220 = vcmp.ge.f32.partialorder %v216, 30.0
        %v221 = vsel %vm220, 1, 0
        %v222 = vcvt.s32.f32 %v221
        %v223 = vpack.c.bf16 %v222, %v222
        %s224 = scalar_lea.vmem %s151, 8 [#allocation7]
        %225 = vst [vmem:[%s224] sm:$0xf] %v223
        %v226 = vsel %vm220, -65.0, %v216
        %v227 = vadd.f32 %v219, 8.0
        %v228 = vsel %vm220, %v227, %v219
        %s229 = scalar_lea.vmem %s133, 12 [#allocation4]
        %v230 = vld [vmem:[%s229] sm:$0xf]
        %v231 = vunpack.c.l.bf16 %v230
        %v232 = vmul.f32 %v226, 0.04
        %v233 = vmul.f32 %v232, %v226
        %v234 = vmul.f32 %v226, 5.0
        %v235 = vadd.f32 %v233, %v234
        %v236 = vadd.f32 %v235, 140.0
        %v237 = vsub.f32 %v236, %v228
        %v238 = vadd.f32 %v237, %v231
        %v239 = vadd.f32 %v226, %v238
        %v240 = vmul.f32 %v228, 0.98
        %v241 = vmul.f32 %v239, 0.004
        %v242 = vadd.f32 %v240, %v241
        %vm243 = vcmp.ge.f32.partialorder %v239, 30.0
        %v244 = vsel %vm243, 1, 0
        %v245 = vcvt.s32.f32 %v244
        %v246 = vpack.c.bf16 %v245, %v245
        %s247 = scalar_lea.vmem %s151, 12 [#allocation7]
        %248 = vst [vmem:[%s247] sm:$0xf] %v246
        %v249 = vsel %vm243, -65.0, %v239
        %v250 = vadd.f32 %v242, 8.0
        %v251 = vsel %vm243, %v250, %v242
        %s252 = scalar_lea.vmem %s133, 16 [#allocation4]
        %v253 = vld [vmem:[%s252] sm:$0xf]
        %v254 = vunpack.c.l.bf16 %v253
        %v255 = vmul.f32 %v249, 0.04
        %v256 = vmul.f32 %v255, %v249
        %v257 = vmul.f32 %v249, 5.0
        %v258 = vadd.f32 %v256, %v257
        %v259 = vadd.f32 %v258, 140.0
        %v260 = vsub.f32 %v259, %v251
        %v261 = vadd.f32 %v260, %v254
        %v262 = vadd.f32 %v249, %v261
        %v263 = vmul.f32 %v251, 0.98
        %v264 = vmul.f32 %v262, 0.004
        %v265 = vadd.f32 %v263, %v264
        %vm266 = vcmp.ge.f32.partialorder %v262, 30.0
        %v267 = vsel %vm266, 1, 0
        %v268 = vcvt.s32.f32 %v267
        %v269 = vpack.c.bf16 %v268, %v268
        %s270 = scalar_lea.vmem %s151, 16 [#allocation7]
        %271 = vst [vmem:[%s270] sm:$0xf] %v269
        %v272 = vsel %vm266, -65.0, %v262
        %v273 = vadd.f32 %v265, 8.0
        %v274 = vsel %vm266, %v273, %v265
        %s275 = scalar_lea.vmem %s133, 20 [#allocation4]
        %v276 = vld [vmem:[%s275] sm:$0xf]
        %v277 = vunpack.c.l.bf16 %v276
        %v278 = vmul.f32 %v272, 0.04
        %v279 = vmul.f32 %v278, %v272
        %v280 = vmul.f32 %v272, 5.0
        %v281 = vadd.f32 %v279, %v280
        %v282 = vadd.f32 %v281, 140.0
        %v283 = vsub.f32 %v282, %v274
        %v284 = vadd.f32 %v283, %v277
        %v285 = vadd.f32 %v272, %v284
        %v286 = vmul.f32 %v274, 0.98
        %v287 = vmul.f32 %v285, 0.004
        %v288 = vadd.f32 %v286, %v287
        %vm289 = vcmp.ge.f32.partialorder %v285, 30.0
        %v290 = vsel %vm289, 1, 0
        %v291 = vcvt.s32.f32 %v290
        %v292 = vpack.c.bf16 %v291, %v291
        %s293 = scalar_lea.vmem %s151, 20 [#allocation7]
        %294 = vst [vmem:[%s293] sm:$0xf] %v292
        %v295 = vsel %vm289, -65.0, %v285
        %v296 = vadd.f32 %v288, 8.0
        %v297 = vsel %vm289, %v296, %v288
        %s298 = scalar_lea.vmem %s133, 24 [#allocation4]
        %v299 = vld [vmem:[%s298] sm:$0xf]
        %v300 = vunpack.c.l.bf16 %v299
        %v301 = vmul.f32 %v295, 0.04
        %v302 = vmul.f32 %v301, %v295
        %v303 = vmul.f32 %v295, 5.0
        %v304 = vadd.f32 %v302, %v303
        %v305 = vadd.f32 %v304, 140.0
        %v306 = vsub.f32 %v305, %v297
        %v307 = vadd.f32 %v306, %v300
        %v308 = vadd.f32 %v295, %v307
        %v309 = vmul.f32 %v297, 0.98
        %v310 = vmul.f32 %v308, 0.004
        %v311 = vadd.f32 %v309, %v310
        %vm312 = vcmp.ge.f32.partialorder %v308, 30.0
        %v313 = vsel %vm312, 1, 0
        %v314 = vcvt.s32.f32 %v313
        %v315 = vpack.c.bf16 %v314, %v314
        %s316 = scalar_lea.vmem %s151, 24 [#allocation7]
        %317 = vst [vmem:[%s316] sm:$0xf] %v315
        %v318 = vsel %vm312, -65.0, %v308
        %v319 = vadd.f32 %v311, 8.0
        %v320 = vsel %vm312, %v319, %v311
        %s321 = scalar_lea.vmem %s133, 28 [#allocation4]
        %v322 = vld [vmem:[%s321] sm:$0xf]
        %v323 = vunpack.c.l.bf16 %v322
        %v324 = vmul.f32 %v318, 0.04
        %v325 = vmul.f32 %v324, %v318
        %v326 = vmul.f32 %v318, 5.0
        %v327 = vadd.f32 %v325, %v326
        %v328 = vadd.f32 %v327, 140.0
        %v329 = vsub.f32 %v328, %v320
        %v330 = vadd.f32 %v329, %v323
        %v331 = vadd.f32 %v318, %v330
        %v332 = vmul.f32 %v320, 0.98
        %v333 = vmul.f32 %v331, 0.004
        %v334 = vadd.f32 %v332, %v333
        %vm335 = vcmp.ge.f32.partialorder %v331, 30.0
        %v336 = vsel %vm335, 1, 0
        %v337 = vcvt.s32.f32 %v336
        %v338 = vpack.c.bf16 %v337, %v337
        %s339 = scalar_lea.vmem %s151, 28 [#allocation7]
        %340 = vst [vmem:[%s339] sm:$0xf] %v338
        %v341 = vsel %vm335, -65.0, %v331
        %v342 = vadd.f32 %v334, 8.0
        %v343 = vsel %vm335, %v342, %v334
        %344 = vst [vmem:[#allocation2] sm:$0xff] %v341
        %345 = vst [vmem:[#allocation3] sm:$0xff] %v343
        %s346 = sand.u32 %s68, 1
        %s347 = scalar_lea.sflag [#allocation6], %s346
        %s348 = sand.u32 %s68, 1
        %s349 = smul.addr %s348, 32
        %s350 = scalar_lea.vmem [#allocation7], %s349
        // Predicated region
        $region33: #{tpu_custom_call.1} parent=23 // pred_check
          %p351 = pneg %p78
        $region34: #{tpu_custom_call.1} parent=23 // pred_check_branch
          %353 = sbr.rel (%p351) target = $region36
        $region35: #{tpu_custom_call.1} parent=23 // pred_region
          %s354 = smul.u32 8, %s23
          %s356 = ssub.s32 512, 512
          %357 = vsyncadd %s347, %s356
          %s358 = sadd.s32 %s22, %s354
          %s359 = smul.addr %s358, 64
          %s360 = scalar_lea.hbm %s1, %s359
          %s361 = sshll.u32 %s350, 4
          %s362 = int_to_ptr.vmem [resolvable:$true] %s361
          %367 = dma.vmem_to_hbm [thread:$0]  %s362, 512, %s360, %s347, 64, 64, 4
        $region36: #{tpu_custom_call.1} parent=23 // pred_fallthru
          _
      $region24: #{tpu_custom_call.1} parent=5 // pred_fallthru
        _
      %p368 = scmp.le.s32.totalorder 2, %s13
      // Predicated region
      $region37: #{tpu_custom_call.1} parent=5 // pred_check
        %p369 = pneg %p368
      $region38: #{tpu_custom_call.1} parent=5 // pred_check_branch
        %371 = sbr.rel (%p369) target = $region40
      $region39: #{tpu_custom_call.1} parent=5 // pred_region
        %s372 = ssub.s32 %s13, 2
        // Predicated region
        $region41: #{tpu_custom_call.1} parent=39 // pred_check
          %p373 = pneg %p84
        $region42: #{tpu_custom_call.1} parent=39 // pred_check_branch
          %375 = sbr.rel (%p373) target = $region44
        $region43: #{tpu_custom_call.1} parent=39 // pred_region
          %s376 = sand.u32 %s69, 1
          %s377 = scalar_lea.sflag [#allocation6], %s376
          %s378 = sand.u32 %s69, 1
          %s379 = smul.addr %s378, 32
          %s380 = scalar_lea.vmem [#allocation7], %s379
          %381 = dma.done %s377, 512
        $region44: #{tpu_custom_call.1} parent=39 // pred_fallthru
          _
      $region40: #{tpu_custom_call.1} parent=5 // pred_fallthru
        _
    $region6: #{tpu_custom_call.1} parent=1 // loop_footer
      %s17 = sadd.s32 1, %s13
    $region7: #{tpu_custom_call.1} parent=1 // loop_footer_branch
      %12 = sbr.rel target = $region3
    $region8: #{tpu_custom_call.1} parent=1 // loop_exit
      _
    %382 = vsyncpa [#allocation5], 1
    %s383 = scalar_lea.sflag [#allocation5], 1
    %384 = vsyncpa %s383, 1
    %385 = vsyncpa [#allocation6], 1
    %s386 = scalar_lea.sflag [#allocation6], 1
    %387 = vsyncpa %s386, 1

</llo_original>
